<compile_context>
chip_gen: v6e
topology: v6e:2x2x1
jax: 0.10.0
libtpu: 0.0.40
codegen_flags: <defaults>
</compile_context>

<pallas_src>
import jax
import jax.numpy as jnp
from jax.experimental import pallas as pl
from jax.experimental.pallas import tpu as pltpu


def _ctg_kernel(x_ref, m_ref, b_ref, o_ref):
    # x_ref: (Nb, C_in*T*V)   batch block, lane-dense
    # m_ref: (C_in*T*V, C_out*T*V)  fused kron(W^T, blockdiag(A)), VMEM-resident
    # b_ref: (1, C_out*T*V)   bias row (b[o] * colsum(A)), VMEM-resident
    # o_ref: (Nb, C_out*T*V)  lane-dense output slab
    acc = jnp.dot(x_ref[...], m_ref[...], preferred_element_type=jnp.float32)
    o_ref[...] = (acc + b_ref[...]).astype(o_ref.dtype)


def _pick_batch_block(n, in_cols, out_cols, fixed_bytes, itemsize,
                      vmem_budget_bytes=28 * 1024 * 1024):
    """Batch rows per grid step, sized for double-buffered VMEM residency."""
    per_elem = (in_cols + out_cols) * itemsize          # one batch row, in + out
    # Budget covers 2x (double-buffering) of everything; safe on v7x (64 MiB
    # physical VMEM, 32 MiB default scoped) as well as v5e/v6e (128 MiB).
    avail = max(vmem_budget_bytes // 2 - fixed_bytes, per_elem)
    nb = max(int(avail // per_elem), 1)
    if n >= 2:
        # Keep >= 2 grid steps so both v7x TensorCores get work, but only when
        # a half-batch block still gives roofline-sized (>= ~0.5 MiB) DMAs.
        half = (n + 1) // 2
        if half * per_elem >= (512 * 1024):
            nb = min(nb, half)
    nb = min(nb, n)
    if nb < n:
        # Blocks along the sublane (second-to-last) dim must be a multiple of 8
        # unless they span the full dim; round up (a few extra masked rows are
        # cheaper than an extra grid step).
        nb = max(((nb + 7) // 8) * 8, 8)
    return nb


def conv_temporal_graphical(x, A, weight, bias):
    """x: (N, C_in, T, V), A: (K=T, V, V), weight: (C_out, C_in), bias: (C_out,).

    Returns (out, A) with out: (N, C_out, T, V), matching the PyTorch module
    with its default (1x1) temporal conv.
    """
    # TODO(synk): t_kernel_size > 1 / t_stride != 1 temporal convolutions are
    # not implemented; the module defaults give a (1,1) pointwise conv.
    N, C_in, T, V = x.shape
    K, Va, Vw = A.shape
    assert K == T and Va == V and Vw == V, "einsum 'nctv,tvw' requires T == K"
    C_out, C_in_w = weight.shape
    assert C_in_w == C_in

    L = T * V
    in_cols, out_cols = C_in * L, C_out * L
    itemsize = jnp.dtype(x.dtype).itemsize

    # ---- Precompute the fused operator once (plain XLA, outside the grid) ----
    # blockdiag(A): bd[t*V+v, s*V+w] = delta(t,s) * A[t,v,w]
    eye_t = jnp.eye(T, dtype=jnp.float32)
    a_bd = (eye_t[:, None, :, None] * A.astype(jnp.float32)[:, :, None, :]
            ).reshape(L, L)
    # BigMat = kron(W^T, blockdiag(A)): fuses the 1x1 conv and the graph matmul.
    big = (weight.astype(jnp.float32).T[:, None, :, None]
           * a_bd[None, :, None, :]).reshape(in_cols, out_cols)
    # Bias distributed through A:  (W x + b) @ A_bd == W x @ A_bd + b * colsum(A)
    colsum = A.astype(jnp.float32).sum(axis=1).reshape(L)            # (T*V,)
    brow = (bias.astype(jnp.float32)[:, None] * colsum[None, :]
            ).reshape(1, out_cols)
    big = big.astype(x.dtype)

    fixed_bytes = in_cols * out_cols * itemsize + out_cols * 4
    # TODO(synk): for very large C_out*T*V the fused operator would need a
    # tiled / two-stage fallback; assert instead of silently spilling VMEM.
    assert fixed_bytes <= 12 * 1024 * 1024, "fused operator too large for VMEM"

    nb = _pick_batch_block(N, in_cols, out_cols, fixed_bytes, itemsize)
    grid = (pl.cdiv(N, nb),)

    x2d = x.reshape(N, in_cols)      # free contiguous reshape, no HBM transpose

    out2d = pl.pallas_call(
        _ctg_kernel,
        out_shape=jax.ShapeDtypeStruct((N, out_cols), x.dtype),
        grid=grid,
        in_specs=[
            pl.BlockSpec((nb, in_cols), lambda i: (i, 0)),
            # Constant index maps: fetched once, stay VMEM-resident across grid.
            pl.BlockSpec((in_cols, out_cols), lambda i: (0, 0)),
            pl.BlockSpec((1, out_cols), lambda i: (0, 0)),
        ],
        out_specs=pl.BlockSpec((nb, out_cols), lambda i: (i, 0)),
        compiler_params=pltpu.CompilerParams(
            # Batch axis is independent -> shards across v7x TensorCores.
            dimension_semantics=("parallel",),
            # Blocks are budgeted to ~28 MiB total; 32 MiB scoped VMEM leaves
            # headroom on v5e/v6e (128 MiB) and v7x (64 MiB physical).
            vmem_limit_bytes=32 * 1024 * 1024),
    )(x2d, big, brow)

    out = out2d.reshape(N, C_out, T, V)          # free reshape back to NCTV
    return out, A


if __name__ == "__main__":
    key = jax.random.PRNGKey(0)
    # Small shapes consistent with the forward: T must equal kernel_size K.
    N, C_in, C_out, T, V = 2, 4, 8, 8, 16
    k1, k2, k3, k4 = jax.random.split(key, 4)

    x = jax.random.normal(k1, (N, C_in, T, V), dtype=jnp.float32)
    A = jax.random.normal(k2, (T, V, V), dtype=jnp.float32)
    # nn.Conv2d(C_in, C_out, kernel_size=(1,1)) weight has shape
    # (C_out, C_in, 1, 1); we store the squeezed (C_out, C_in) matrix.
    weight = jax.random.normal(k3, (C_out, C_in), dtype=jnp.float32) * 0.1
    bias = jax.random.normal(k4, (C_out,), dtype=jnp.float32) * 0.1

    out, A_out = conv_temporal_graphical(x, A, weight, bias)
    out = jax.block_until_ready(out)

    # Plain-JAX reference for the exact PyTorch semantics.
    y_ref = jnp.einsum('oc,nctv->notv', weight, x) + bias[None, :, None, None]
    ref = jnp.einsum('nctv,tvw->nctw', y_ref, A)
    assert out.shape == (N, C_out, T, V)
    assert A_out.shape == A.shape
    assert jnp.allclose(out, ref, atol=1e-4, rtol=1e-4), "mismatch vs reference"

    print("KERNEL_OK")
</pallas_src>

<mosaic_0001>
module attributes {stable_mosaic.version = 11 : i64} {
  func.func @_ctg_kernel(%arg0: i32, %arg1: memref<2x512xf32, #tpu.memory_space<vmem>>, %arg2: memref<512x1024xf32, #tpu.memory_space<vmem>>, %arg3: memref<1x1024xf32, #tpu.memory_space<vmem>>, %arg4: memref<2x1024xf32, #tpu.memory_space<vmem>>) attributes {dimension_semantics = [#tpu.dimension_semantics<parallel>], iteration_bounds = array<i64: 1>, scalar_prefetch = 0 : i64, scratch_operands = 0 : i64, tpu.core_type = #tpu.core_type<tc>, window_params = [{transform_indices = @transform_0, window_bounds = array<i64: 2, 512>}, {pipeline_mode = #tpu.pipeline_mode<synchronous>, transform_indices = @transform_1, window_bounds = array<i64: 512, 1024>}, {pipeline_mode = #tpu.pipeline_mode<synchronous>, transform_indices = @transform_2, window_bounds = array<i64: 1, 1024>}, {transform_indices = @transform_3, window_bounds = array<i64: 2, 1024>}]} {
    %c0 = arith.constant 0 : index
    %c0_0 = arith.constant 0 : index
    %0 = vector.load %arg1[%c0, %c0_0] : memref<2x512xf32, #tpu.memory_space<vmem>>, vector<2x512xf32>
    %c0_1 = arith.constant 0 : index
    %c0_2 = arith.constant 0 : index
    %1 = vector.load %arg2[%c0_1, %c0_2] : memref<512x1024xf32, #tpu.memory_space<vmem>>, vector<512x1024xf32>
    %cst = arith.constant dense<0.000000e+00> : vector<2x1024xf32>
    %2 = tpu.matmul %0, %1, %cst {dimension_numbers = #tpu.dot_dimension_numbers<[1], [0], [0], [1], [0, 0, 1, 1], [], []>} : vector<2x512xf32>, vector<512x1024xf32>, vector<2x1024xf32> -> vector<2x1024xf32>
    %c0_3 = arith.constant 0 : index
    %c0_4 = arith.constant 0 : index
    %3 = vector.load %arg3[%c0_3, %c0_4] : memref<1x1024xf32, #tpu.memory_space<vmem>>, vector<1x1024xf32>
    %4 = vector.broadcast %3 : vector<1x1024xf32> to vector<2x1024xf32>
    %5 = arith.addf %2, %4 : vector<2x1024xf32>
    %c0_5 = arith.constant 0 : index
    %c0_6 = arith.constant 0 : index
    %6 = vector.load %arg4[%c0_5, %c0_6] : memref<2x1024xf32, #tpu.memory_space<vmem>>, vector<2x1024xf32>
    tpu.vector_store %arg4[%c0_5, %c0_6], %5 {strides = array<i32>} : memref<2x1024xf32, #tpu.memory_space<vmem>>, vector<2x1024xf32>,
    return
  }
  func.func @transform_0(%arg0: i32) -> (i32, i32) {
    %c0_i32 = arith.constant 0 : i32
    %c0_i32_0 = arith.constant 0 : i32
    return %arg0, %c0_i32 : i32, i32
  }
  func.func @transform_1(%arg0: i32) -> (i32, i32) {
    %c0_i32 = arith.constant 0 : i32
    %c0_i32_0 = arith.constant 0 : i32
    %c0_i32_1 = arith.constant 0 : i32
    return %c0_i32, %c0_i32_0 : i32, i32
  }
  func.func @transform_2(%arg0: i32) -> (i32, i32) {
    %c0_i32 = arith.constant 0 : i32
    %c0_i32_0 = arith.constant 0 : i32
    %c0_i32_1 = arith.constant 0 : i32
    return %c0_i32, %c0_i32_0 : i32, i32
  }
  func.func @transform_3(%arg0: i32) -> (i32, i32) {
    %c0_i32 = arith.constant 0 : i32
    %c0_i32_0 = arith.constant 0 : i32
    return %arg0, %c0_i32 : i32, i32
  }
}

</mosaic_0001>

<llo_original>
// kernel: tpu_custom_call.1
$region0: #{tpu_custom_call.1}
  #allocation0 [shape = 'u32[]', space=smem, size = 0x4, offset = 0x4, fixed_abs, tag = 'smem constant byte address 0x4 - core index']
  #allocation1 [shape = 'u32[144,128]{1,0:T(1,128)}', space=vmem, size = 0x12000, scoped, tag = 'internal scratch']
  %s0 = inlined_call_operand.hbm [shape: f32[2,512], index: 0, kind: input, shape index: {}]
  %s1 = inlined_call_operand.hbm [shape: f32[512,1024], index: 1, kind: input, shape index: {}]
  %s2 = inlined_call_operand.hbm [shape: f32[1,1024], index: 2, kind: input, shape index: {}]
  %s3 = inlined_call_operand.hbm [shape: f32[2,1024], index: 3, kind: output, shape index: {}]
  %s4 = sld [smem:[#allocation0]]
  $region34: #{tpu_custom_call.1} parent=0
    _
  %s6 = ssub.s32 1, %s4
  %s7 = scalar_select 0, %s6, %s4
  $region1: #{tpu_custom_call.1} parent=0
    #allocation2 [shape = 'u8[4096]{0}', space=vmem, size = 0x1000, scoped, tag = 'input window, operand 0, single buffered']
    #allocation3 [shape = 's32[1]{0}', space=sflag, size = 0x4, scoped, tag = 'scoped memory for tpu_custom_call.1']
    #allocation4 [shape = 's32[1]{0}', space=sflag, size = 0x4, scoped, tag = 'scoped memory for tpu_custom_call.1']
    #allocation5 [shape = 'u8[2097152]{0}', space=vmem, size = 0x200000, scoped, tag = 'input window, operand 1, single buffered']
    #allocation6 [shape = 's32[1]{0}', space=sflag, size = 0x4, scoped, tag = 'scoped memory for tpu_custom_call.1']
    #allocation7 [shape = 'u8[4096]{0}', space=vmem, size = 0x1000, scoped, tag = 'input window, operand 2, single buffered']
    #allocation8 [shape = 'u8[8192]{0}', space=vmem, size = 0x2000, scoped, tag = 'output window, operand 0, single buffered']
    %8 = vsyncpa [#allocation3], 0
    %9 = vsyncpa [#allocation6], 0
    %10 = vsyncpa [#allocation4], 0
    // Predicated region
    $region2: #{tpu_custom_call.1} parent=1 // pred_check
      _
    $region3: #{tpu_custom_call.1} parent=1 // pred_check_branch
      %12 = sbr.rel (0) target = $region5
    $region4: #{tpu_custom_call.1} parent=1 // pred_region
      %s14 = ssub.s32 128, 128
      %15 = vsyncadd [#allocation3], %s14
      %s17 = sshll.u32 [#allocation2], 4
      %s18 = int_to_ptr.vmem [resolvable:$true] %s17
      %20 = dma.hbm_to_vmem [thread:$0]  %s0, 128, %s18, [#allocation3]
    $region5: #{tpu_custom_call.1} parent=1 // pred_fallthru
      _
    // Predicated region
    $region6: #{tpu_custom_call.1} parent=1 // pred_check
      _
    $region7: #{tpu_custom_call.1} parent=1 // pred_check_branch
      %22 = sbr.rel (0) target = $region9
    $region8: #{tpu_custom_call.1} parent=1 // pred_region
      %s24 = ssub.s32 65536, 65536
      %25 = vsyncadd [#allocation6], %s24
      %s26 = sshll.u32 [#allocation5], 4
      %s27 = int_to_ptr.vmem [resolvable:$true] %s26
      %32 = dma.hbm_to_vmem [thread:$0]  %s1, 65536, %s27, [#allocation6], 1024, 1024, 64
    $region9: #{tpu_custom_call.1} parent=1 // pred_fallthru
      _
    // Predicated region
    $region10: #{tpu_custom_call.1} parent=1 // pred_check
      _
    $region11: #{tpu_custom_call.1} parent=1 // pred_check_branch
      %34 = sbr.rel (0) target = $region13
    $region12: #{tpu_custom_call.1} parent=1 // pred_region
      %s36 = ssub.s32 128, 128
      %37 = vsyncadd [#allocation6], %s36
      %s39 = sshll.u32 [#allocation7], 4
      %s40 = int_to_ptr.vmem [resolvable:$true] %s39
      %42 = dma.hbm_to_vmem [thread:$0]  %s2, 128, %s40, [#allocation6]
    $region13: #{tpu_custom_call.1} parent=1 // pred_fallthru
      _
    // Predicated region
    $region14: #{tpu_custom_call.1} parent=1 // pred_check
      _
    $region15: #{tpu_custom_call.1} parent=1 // pred_check_branch
      %44 = sbr.rel (0) target = $region17
    $region16: #{tpu_custom_call.1} parent=1 // pred_region
      %45 = dma.done [#allocation3], 128
    $region17: #{tpu_custom_call.1} parent=1 // pred_fallthru
      _
    // Predicated region
    $region18: #{tpu_custom_call.1} parent=1 // pred_check
      _
    $region19: #{tpu_custom_call.1} parent=1 // pred_check_branch
      %47 = sbr.rel (0) target = $region21
    $region20: #{tpu_custom_call.1} parent=1 // pred_region
      %48 = dma.done [#allocation6], 65536
    $region21: #{tpu_custom_call.1} parent=1 // pred_fallthru
      _
    // Predicated region
    $region22: #{tpu_custom_call.1} parent=1 // pred_check
      _
    $region23: #{tpu_custom_call.1} parent=1 // pred_check_branch
      %50 = sbr.rel (0) target = $region25
    $region24: #{tpu_custom_call.1} parent=1 // pred_region
      %51 = dma.done [#allocation6], 128
    $region25: #{tpu_custom_call.1} parent=1 // pred_fallthru
      _
    %v52 = vld [vmem:[#allocation2] sm:$0xff]
    %v53 = vld [vmem:[#allocation5] sm:$0xff]
    %v54 = vld [vmem:[#allocation5 + $0x8] sm:$0xff]
    %v55 = vld [vmem:[#allocation5 + $0x10] sm:$0xff]
    %v56 = vld [vmem:[#allocation5 + $0x18] sm:$0xff]
    %v57 = vld [vmem:[#allocation5 + $0x20] sm:$0xff]
    %v58 = vld [vmem:[#allocation5 + $0x28] sm:$0xff]
    %v59 = vld [vmem:[#allocation5 + $0x30] sm:$0xff]
    %v60 = vld [vmem:[#allocation5 + $0x38] sm:$0xff]
    %v61 = vld [vmem:[#allocation5 + $0x40] sm:$0xff]
    %v62 = vld [vmem:[#allocation5 + $0x48] sm:$0xff]
    %v63 = vld [vmem:[#allocation5 + $0x50] sm:$0xff]
    %v64 = vld [vmem:[#allocation5 + $0x58] sm:$0xff]
    %v65 = vld [vmem:[#allocation5 + $0x60] sm:$0xff]
    %v66 = vld [vmem:[#allocation5 + $0x68] sm:$0xff]
    %v67 = vld [vmem:[#allocation5 + $0x70] sm:$0xff]
    %v68 = vld [vmem:[#allocation5 + $0x78] sm:$0xff]
    %v69 = vld [vmem:[#allocation5 + $0x80] sm:$0xff]
    %v70 = vld [vmem:[#allocation5 + $0x88] sm:$0xff]
    %v71 = vld [vmem:[#allocation5 + $0x90] sm:$0xff]
    %v72 = vld [vmem:[#allocation5 + $0x98] sm:$0xff]
    %v73 = vld [vmem:[#allocation5 + $0xa0] sm:$0xff]
    %v74 = vld [vmem:[#allocation5 + $0xa8] sm:$0xff]
    %v75 = vld [vmem:[#allocation5 + $0xb0] sm:$0xff]
    %v76 = vld [vmem:[#allocation5 + $0xb8] sm:$0xff]
    %v77 = vld [vmem:[#allocation5 + $0xc0] sm:$0xff]
    %v78 = vld [vmem:[#allocation5 + $0xc8] sm:$0xff]
    %v79 = vld [vmem:[#allocation5 + $0xd0] sm:$0xff]
    %v80 = vld [vmem:[#allocation5 + $0xd8] sm:$0xff]
    %v81 = vld [vmem:[#allocation5 + $0xe0] sm:$0xff]
    %v82 = vld [vmem:[#allocation5 + $0xe8] sm:$0xff]
    %v83 = vld [vmem:[#allocation5 + $0xf0] sm:$0xff]
    %v84 = vld [vmem:[#allocation5 + $0xf8] sm:$0xff]
    %v85 = vld [vmem:[#allocation5 + $0x100] sm:$0xff]
    %v86 = vld [vmem:[#allocation5 + $0x108] sm:$0xff]
    %v87 = vld [vmem:[#allocation5 + $0x110] sm:$0xff]
    %v88 = vld [vmem:[#allocation5 + $0x118] sm:$0xff]
    %v89 = vld [vmem:[#allocation5 + $0x120] sm:$0xff]
    %v90 = vld [vmem:[#allocation5 + $0x128] sm:$0xff]
    %v91 = vld [vmem:[#allocation5 + $0x130] sm:$0xff]
    %v92 = vld [vmem:[#allocation5 + $0x138] sm:$0xff]
    %v93 = vld [vmem:[#allocation5 + $0x140] sm:$0xff]
    %v94 = vld [vmem:[#allocation5 + $0x148] sm:$0xff]
    %v95 = vld [vmem:[#allocation5 + $0x150] sm:$0xff]
    %v96 = vld [vmem:[#allocation5 + $0x158] sm:$0xff]
    %v97 = vld [vmem:[#allocation5 + $0x160] sm:$0xff]
    %v98 = vld [vmem:[#allocation5 + $0x168] sm:$0xff]
    %v99 = vld [vmem:[#allocation5 + $0x170] sm:$0xff]
    %v100 = vld [vmem:[#allocation5 + $0x178] sm:$0xff]
    %v101 = vld [vmem:[#allocation5 + $0x180] sm:$0xff]
    %v102 = vld [vmem:[#allocation5 + $0x188] sm:$0xff]
    %v103 = vld [vmem:[#allocation5 + $0x190] sm:$0xff]
    %v104 = vld [vmem:[#allocation5 + $0x198] sm:$0xff]
    %v105 = vld [vmem:[#allocation5 + $0x1a0] sm:$0xff]
    %v106 = vld [vmem:[#allocation5 + $0x1a8] sm:$0xff]
    %v107 = vld [vmem:[#allocation5 + $0x1b0] sm:$0xff]
    %v108 = vld [vmem:[#allocation5 + $0x1b8] sm:$0xff]
    %v109 = vld [vmem:[#allocation5 + $0x1c0] sm:$0xff]
    %v110 = vld [vmem:[#allocation5 + $0x1c8] sm:$0xff]
    %v111 = vld [vmem:[#allocation5 + $0x1d0] sm:$0xff]
    %v112 = vld [vmem:[#allocation5 + $0x1d8] sm:$0xff]
    %v113 = vld [vmem:[#allocation5 + $0x1e0] sm:$0xff]
    %v114 = vld [vmem:[#allocation5 + $0x1e8] sm:$0xff]
    %v115 = vld [vmem:[#allocation5 + $0x1f0] sm:$0xff]
    %v116 = vld [vmem:[#allocation5 + $0x1f8] sm:$0xff]
    %v117 = vld [vmem:[#allocation5 + $0x200] sm:$0xff]
    %v118 = vld [vmem:[#allocation5 + $0x208] sm:$0xff]
    %v119 = vld [vmem:[#allocation5 + $0x210] sm:$0xff]
    %v120 = vld [vmem:[#allocation5 + $0x218] sm:$0xff]
    %v121 = vld [vmem:[#allocation5 + $0x220] sm:$0xff]
    %v122 = vld [vmem:[#allocation5 + $0x228] sm:$0xff]
    %v123 = vld [vmem:[#allocation5 + $0x230] sm:$0xff]
    %v124 = vld [vmem:[#allocation5 + $0x238] sm:$0xff]
    %v125 = vld [vmem:[#allocation5 + $0x240] sm:$0xff]
    %v126 = vld [vmem:[#allocation5 + $0x248] sm:$0xff]
    %v127 = vld [vmem:[#allocation5 + $0x250] sm:$0xff]
    %v128 = vld [vmem:[#allocation5 + $0x258] sm:$0xff]
    %v129 = vld [vmem:[#allocation5 + $0x260] sm:$0xff]
    %v130 = vld [vmem:[#allocation5 + $0x268] sm:$0xff]
    %v131 = vld [vmem:[#allocation5 + $0x270] sm:$0xff]
    %v132 = vld [vmem:[#allocation5 + $0x278] sm:$0xff]
    %v133 = vld [vmem:[#allocation5 + $0x280] sm:$0xff]
    %v134 = vld [vmem:[#allocation5 + $0x288] sm:$0xff]
    %v135 = vld [vmem:[#allocation5 + $0x290] sm:$0xff]
    %v136 = vld [vmem:[#allocation5 + $0x298] sm:$0xff]
    %v137 = vld [vmem:[#allocation5 + $0x2a0] sm:$0xff]
    %v138 = vld [vmem:[#allocation5 + $0x2a8] sm:$0xff]
    %v139 = vld [vmem:[#allocation5 + $0x2b0] sm:$0xff]
    %v140 = vld [vmem:[#allocation5 + $0x2b8] sm:$0xff]
    %v141 = vld [vmem:[#allocation5 + $0x2c0] sm:$0xff]
    %v142 = vld [vmem:[#allocation5 + $0x2c8] sm:$0xff]
    %v143 = vld [vmem:[#allocation5 + $0x2d0] sm:$0xff]
    %v144 = vld [vmem:[#allocation5 + $0x2d8] sm:$0xff]
    %v145 = vld [vmem:[#allocation5 + $0x2e0] sm:$0xff]
    %v146 = vld [vmem:[#allocation5 + $0x2e8] sm:$0xff]
    %v147 = vld [vmem:[#allocation5 + $0x2f0] sm:$0xff]
    %v148 = vld [vmem:[#allocation5 + $0x2f8] sm:$0xff]
    %v149 = vld [vmem:[#allocation5 + $0x300] sm:$0xff]
    %v150 = vld [vmem:[#allocation5 + $0x308] sm:$0xff]
    %v151 = vld [vmem:[#allocation5 + $0x310] sm:$0xff]
    %v152 = vld [vmem:[#allocation5 + $0x318] sm:$0xff]
    %v153 = vld [vmem:[#allocation5 + $0x320] sm:$0xff]
    %v154 = vld [vmem:[#allocation5 + $0x328] sm:$0xff]
    %v155 = vld [vmem:[#allocation5 + $0x330] sm:$0xff]
    %v156 = vld [vmem:[#allocation5 + $0x338] sm:$0xff]
    %v157 = vld [vmem:[#allocation5 + $0x340] sm:$0xff]
    %v158 = vld [vmem:[#allocation5 + $0x348] sm:$0xff]
    %v159 = vld [vmem:[#allocation5 + $0x350] sm:$0xff]
    %v160 = vld [vmem:[#allocation5 + $0x358] sm:$0xff]
    %v161 = vld [vmem:[#allocation5 + $0x360] sm:$0xff]
    %v162 = vld [vmem:[#allocation5 + $0x368] sm:$0xff]
    %v163 = vld [vmem:[#allocation5 + $0x370] sm:$0xff]
    %v164 = vld [vmem:[#allocation5 + $0x378] sm:$0xff]
    %v165 = vld [vmem:[#allocation5 + $0x380] sm:$0xff]
    %v166 = vld [vmem:[#allocation5 + $0x388] sm:$0xff]
    %v167 = vld [vmem:[#allocation5 + $0x390] sm:$0xff]
    %v168 = vld [vmem:[#allocation5 + $0x398] sm:$0xff]
    %v169 = vld [vmem:[#allocation5 + $0x3a0] sm:$0xff]
    %v170 = vld [vmem:[#allocation5 + $0x3a8] sm:$0xff]
    %v171 = vld [vmem:[#allocation5 + $0x3b0] sm:$0xff]
    %v172 = vld [vmem:[#allocation5 + $0x3b8] sm:$0xff]
    %v173 = vld [vmem:[#allocation5 + $0x3c0] sm:$0xff]
    %v174 = vld [vmem:[#allocation5 + $0x3c8] sm:$0xff]
    %v175 = vld [vmem:[#allocation5 + $0x3d0] sm:$0xff]
    %v176 = vld [vmem:[#allocation5 + $0x3d8] sm:$0xff]
    %v177 = vld [vmem:[#allocation5 + $0x3e0] sm:$0xff]
    %v178 = vld [vmem:[#allocation5 + $0x3e8] sm:$0xff]
    %v179 = vld [vmem:[#allocation5 + $0x3f0] sm:$0xff]
    %v180 = vld [vmem:[#allocation5 + $0x3f8] sm:$0xff]
    %v181 = vld [vmem:[#allocation5 + $0x400] sm:$0xff]
    %v182 = vld [vmem:[#allocation5 + $0x408] sm:$0xff]
    %v183 = vld [vmem:[#allocation5 + $0x410] sm:$0xff]
    %v184 = vld [vmem:[#allocation5 + $0x418] sm:$0xff]
    %v185 = vld [vmem:[#allocation5 + $0x420] sm:$0xff]
    %v186 = vld [vmem:[#allocation5 + $0x428] sm:$0xff]
    %v187 = vld [vmem:[#allocation5 + $0x430] sm:$0xff]
    %v188 = vld [vmem:[#allocation5 + $0x438] sm:$0xff]
    %v189 = vld [vmem:[#allocation5 + $0x440] sm:$0xff]
    %v190 = vld [vmem:[#allocation5 + $0x448] sm:$0xff]
    %v191 = vld [vmem:[#allocation5 + $0x450] sm:$0xff]
    %v192 = vld [vmem:[#allocation5 + $0x458] sm:$0xff]
    %v193 = vld [vmem:[#allocation5 + $0x460] sm:$0xff]
    %v194 = vld [vmem:[#allocation5 + $0x468] sm:$0xff]
    %v195 = vld [vmem:[#allocation5 + $0x470] sm:$0xff]
    %v196 = vld [vmem:[#allocation5 + $0x478] sm:$0xff]
    %v197 = vld [vmem:[#allocation5 + $0x480] sm:$0xff]
    %v198 = vld [vmem:[#allocation5 + $0x488] sm:$0xff]
    %v199 = vld [vmem:[#allocation5 + $0x490] sm:$0xff]
    %v200 = vld [vmem:[#allocation5 + $0x498] sm:$0xff]
    %v201 = vld [vmem:[#allocation5 + $0x4a0] sm:$0xff]
    %v202 = vld [vmem:[#allocation5 + $0x4a8] sm:$0xff]
    %v203 = vld [vmem:[#allocation5 + $0x4b0] sm:$0xff]
    %v204 = vld [vmem:[#allocation5 + $0x4b8] sm:$0xff]
    %v205 = vld [vmem:[#allocation5 + $0x4c0] sm:$0xff]
    %v206 = vld [vmem:[#allocation5 + $0x4c8] sm:$0xff]
    %v207 = vld [vmem:[#allocation5 + $0x4d0] sm:$0xff]
    %v208 = vld [vmem:[#allocation5 + $0x4d8] sm:$0xff]
    %v209 = vld [vmem:[#allocation5 + $0x4e0] sm:$0xff]
    %v210 = vld [vmem:[#allocation5 + $0x4e8] sm:$0xff]
    %v211 = vld [vmem:[#allocation5 + $0x4f0] sm:$0xff]
    %v212 = vld [vmem:[#allocation5 + $0x4f8] sm:$0xff]
    %v213 = vld [vmem:[#allocation5 + $0x500] sm:$0xff]
    %v214 = vld [vmem:[#allocation5 + $0x508] sm:$0xff]
    %v215 = vld [vmem:[#allocation5 + $0x510] sm:$0xff]
    %v216 = vld [vmem:[#allocation5 + $0x518] sm:$0xff]
    %v217 = vld [vmem:[#allocation5 + $0x520] sm:$0xff]
    %v218 = vld [vmem:[#allocation5 + $0x528] sm:$0xff]
    %v219 = vld [vmem:[#allocation5 + $0x530] sm:$0xff]
    %v220 = vld [vmem:[#allocation5 + $0x538] sm:$0xff]
    %v221 = vld [vmem:[#allocation5 + $0x540] sm:$0xff]
    %v222 = vld [vmem:[#allocation5 + $0x548] sm:$0xff]
    %v223 = vld [vmem:[#allocation5 + $0x550] sm:$0xff]
    %v224 = vld [vmem:[#allocation5 + $0x558] sm:$0xff]
    %v225 = vld [vmem:[#allocation5 + $0x560] sm:$0xff]
    %v226 = vld [vmem:[#allocation5 + $0x568] sm:$0xff]
    %v227 = vld [vmem:[#allocation5 + $0x570] sm:$0xff]
    %v228 = vld [vmem:[#allocation5 + $0x578] sm:$0xff]
    %v229 = vld [vmem:[#allocation5 + $0x580] sm:$0xff]
    %v230 = vld [vmem:[#allocation5 + $0x588] sm:$0xff]
    %v231 = vld [vmem:[#allocation5 + $0x590] sm:$0xff]
    %v232 = vld [vmem:[#allocation5 + $0x598] sm:$0xff]
    %v233 = vld [vmem:[#allocation5 + $0x5a0] sm:$0xff]
    %v234 = vld [vmem:[#allocation5 + $0x5a8] sm:$0xff]
    %v235 = vld [vmem:[#allocation5 + $0x5b0] sm:$0xff]
    %v236 = vld [vmem:[#allocation5 + $0x5b8] sm:$0xff]
    %v237 = vld [vmem:[#allocation5 + $0x5c0] sm:$0xff]
    %v238 = vld [vmem:[#allocation5 + $0x5c8] sm:$0xff]
    %v239 = vld [vmem:[#allocation5 + $0x5d0] sm:$0xff]
    %v240 = vld [vmem:[#allocation5 + $0x5d8] sm:$0xff]
    %v241 = vld [vmem:[#allocation5 + $0x5e0] sm:$0xff]
    %v242 = vld [vmem:[#allocation5 + $0x5e8] sm:$0xff]
    %v243 = vld [vmem:[#allocation5 + $0x5f0] sm:$0xff]
    %v244 = vld [vmem:[#allocation5 + $0x5f8] sm:$0xff]
    %v245 = vld [vmem:[#allocation5 + $0x600] sm:$0xff]
    %v246 = vld [vmem:[#allocation5 + $0x608] sm:$0xff]
    %v247 = vld [vmem:[#allocation5 + $0x610] sm:$0xff]
    %v248 = vld [vmem:[#allocation5 + $0x618] sm:$0xff]
    %v249 = vld [vmem:[#allocation5 + $0x620] sm:$0xff]
    %v250 = vld [vmem:[#allocation5 + $0x628] sm:$0xff]
    %v251 = vld [vmem:[#allocation5 + $0x630] sm:$0xff]
    %v252 = vld [vmem:[#allocation5 + $0x638] sm:$0xff]
    %v253 = vld [vmem:[#allocation5 + $0x640] sm:$0xff]
    %v254 = vld [vmem:[#allocation5 + $0x648] sm:$0xff]
    %v255 = vld [vmem:[#allocation5 + $0x650] sm:$0xff]
    %v256 = vld [vmem:[#allocation5 + $0x658] sm:$0xff]
    %v257 = vld [vmem:[#allocation5 + $0x660] sm:$0xff]
    %v258 = vld [vmem:[#allocation5 + $0x668] sm:$0xff]
    %v259 = vld [vmem:[#allocation5 + $0x670] sm:$0xff]
    %v260 = vld [vmem:[#allocation5 + $0x678] sm:$0xff]
    %v261 = vld [vmem:[#allocation5 + $0x680] sm:$0xff]
    %v262 = vld [vmem:[#allocation5 + $0x688] sm:$0xff]
    %v263 = vld [vmem:[#allocation5 + $0x690] sm:$0xff]
    %v264 = vld [vmem:[#allocation5 + $0x698] sm:$0xff]
    %v265 = vld [vmem:[#allocation5 + $0x6a0] sm:$0xff]
    %v266 = vld [vmem:[#allocation5 + $0x6a8] sm:$0xff]
    %v267 = vld [vmem:[#allocation5 + $0x6b0] sm:$0xff]
    %v268 = vld [vmem:[#allocation5 + $0x6b8] sm:$0xff]
    %v269 = vld [vmem:[#allocation5 + $0x6c0] sm:$0xff]
    %v270 = vld [vmem:[#allocation5 + $0x6c8] sm:$0xff]
    %v271 = vld [vmem:[#allocation5 + $0x6d0] sm:$0xff]
    %v272 = vld [vmem:[#allocation5 + $0x6d8] sm:$0xff]
    %v273 = vld [vmem:[#allocation5 + $0x6e0] sm:$0xff]
    %v274 = vld [vmem:[#allocation5 + $0x6e8] sm:$0xff]
    %v275 = vld [vmem:[#allocation5 + $0x6f0] sm:$0xff]
    %v276 = vld [vmem:[#allocation5 + $0x6f8] sm:$0xff]
    %v277 = vld [vmem:[#allocation5 + $0x700] sm:$0xff]
    %v278 = vld [vmem:[#allocation5 + $0x708] sm:$0xff]
    %v279 = vld [vmem:[#allocation5 + $0x710] sm:$0xff]
    %v280 = vld [vmem:[#allocation5 + $0x718] sm:$0xff]
    %v281 = vld [vmem:[#allocation5 + $0x720] sm:$0xff]
    %v282 = vld [vmem:[#allocation5 + $0x728] sm:$0xff]
    %v283 = vld [vmem:[#allocation5 + $0x730] sm:$0xff]
    %v284 = vld [vmem:[#allocation5 + $0x738] sm:$0xff]
    %v285 = vld [vmem:[#allocation5 + $0x740] sm:$0xff]
    %v286 = vld [vmem:[#allocation5 + $0x748] sm:$0xff]
    %v287 = vld [vmem:[#allocation5 + $0x750] sm:$0xff]
    %v288 = vld [vmem:[#allocation5 + $0x758] sm:$0xff]
    %v289 = vld [vmem:[#allocation5 + $0x760] sm:$0xff]
    %v290 = vld [vmem:[#allocation5 + $0x768] sm:$0xff]
    %v291 = vld [vmem:[#allocation5 + $0x770] sm:$0xff]
    %v292 = vld [vmem:[#allocation5 + $0x778] sm:$0xff]
    %v293 = vld [vmem:[#allocation5 + $0x780] sm:$0xff]
    %v294 = vld [vmem:[#allocation5 + $0x788] sm:$0xff]
    %v295 = vld [vmem:[#allocation5 + $0x790] sm:$0xff]
    %v296 = vld [vmem:[#allocation5 + $0x798] sm:$0xff]
    %v297 = vld [vmem:[#allocation5 + $0x7a0] sm:$0xff]
    %v298 = vld [vmem:[#allocation5 + $0x7a8] sm:$0xff]
    %v299 = vld [vmem:[#allocation5 + $0x7b0] sm:$0xff]
    %v300 = vld [vmem:[#allocation5 + $0x7b8] sm:$0xff]
    %v301 = vld [vmem:[#allocation5 + $0x7c0] sm:$0xff]
    %v302 = vld [vmem:[#allocation5 + $0x7c8] sm:$0xff]
    %v303 = vld [vmem:[#allocation5 + $0x7d0] sm:$0xff]
    %v304 = vld [vmem:[#allocation5 + $0x7d8] sm:$0xff]
    %v305 = vld [vmem:[#allocation5 + $0x7e0] sm:$0xff]
    %v306 = vld [vmem:[#allocation5 + $0x7e8] sm:$0xff]
    %v307 = vld [vmem:[#allocation5 + $0x7f0] sm:$0xff]
    %v308 = vld [vmem:[#allocation5 + $0x7f8] sm:$0xff]
    %v309 = vld [vmem:[#allocation5 + $0x800] sm:$0xff]
    %v310 = vld [vmem:[#allocation5 + $0x808] sm:$0xff]
    %v311 = vld [vmem:[#allocation5 + $0x810] sm:$0xff]
    %v312 = vld [vmem:[#allocation5 + $0x818] sm:$0xff]
    %v313 = vld [vmem:[#allocation5 + $0x820] sm:$0xff]
    %v314 = vld [vmem:[#allocation5 + $0x828] sm:$0xff]
    %v315 = vld [vmem:[#allocation5 + $0x830] sm:$0xff]
    %v316 = vld [vmem:[#allocation5 + $0x838] sm:$0xff]
    %v317 = vld [vmem:[#allocation5 + $0x840] sm:$0xff]
    %v318 = vld [vmem:[#allocation5 + $0x848] sm:$0xff]
    %v319 = vld [vmem:[#allocation5 + $0x850] sm:$0xff]
    %v320 = vld [vmem:[#allocation5 + $0x858] sm:$0xff]
    %v321 = vld [vmem:[#allocation5 + $0x860] sm:$0xff]
    %v322 = vld [vmem:[#allocation5 + $0x868] sm:$0xff]
    %v323 = vld [vmem:[#allocation5 + $0x870] sm:$0xff]
    %v324 = vld [vmem:[#allocation5 + $0x878] sm:$0xff]
    %v325 = vld [vmem:[#allocation5 + $0x880] sm:$0xff]
    %v326 = vld [vmem:[#allocation5 + $0x888] sm:$0xff]
    %v327 = vld [vmem:[#allocation5 + $0x890] sm:$0xff]
    %v328 = vld [vmem:[#allocation5 + $0x898] sm:$0xff]
    %v329 = vld [vmem:[#allocation5 + $0x8a0] sm:$0xff]
    %v330 = vld [vmem:[#allocation5 + $0x8a8] sm:$0xff]
    %v331 = vld [vmem:[#allocation5 + $0x8b0] sm:$0xff]
    %v332 = vld [vmem:[#allocation5 + $0x8b8] sm:$0xff]
    %v333 = vld [vmem:[#allocation5 + $0x8c0] sm:$0xff]
    %v334 = vld [vmem:[#allocation5 + $0x8c8] sm:$0xff]
    %v335 = vld [vmem:[#allocation5 + $0x8d0] sm:$0xff]
    %v336 = vld [vmem:[#allocation5 + $0x8d8] sm:$0xff]
    %v337 = vld [vmem:[#allocation5 + $0x8e0] sm:$0xff]
    %v338 = vld [vmem:[#allocation5 + $0x8e8] sm:$0xff]
    %v339 = vld [vmem:[#allocation5 + $0x8f0] sm:$0xff]
    %v340 = vld [vmem:[#allocation5 + $0x8f8] sm:$0xff]
    %v341 = vld [vmem:[#allocation5 + $0x900] sm:$0xff]
    %v342 = vld [vmem:[#allocation5 + $0x908] sm:$0xff]
    %v343 = vld [vmem:[#allocation5 + $0x910] sm:$0xff]
    %v344 = vld [vmem:[#allocation5 + $0x918] sm:$0xff]
    %v345 = vld [vmem:[#allocation5 + $0x920] sm:$0xff]
    %v346 = vld [vmem:[#allocation5 + $0x928] sm:$0xff]
    %v347 = vld [vmem:[#allocation5 + $0x930] sm:$0xff]
    %v348 = vld [vmem:[#allocation5 + $0x938] sm:$0xff]
    %v349 = vld [vmem:[#allocation5 + $0x940] sm:$0xff]
    %v350 = vld [vmem:[#allocation5 + $0x948] sm:$0xff]
    %v351 = vld [vmem:[#allocation5 + $0x950] sm:$0xff]
    %v352 = vld [vmem:[#allocation5 + $0x958] sm:$0xff]
    %v353 = vld [vmem:[#allocation5 + $0x960] sm:$0xff]
    %v354 = vld [vmem:[#allocation5 + $0x968] sm:$0xff]
    %v355 = vld [vmem:[#allocation5 + $0x970] sm:$0xff]
    %v356 = vld [vmem:[#allocation5 + $0x978] sm:$0xff]
    %v357 = vld [vmem:[#allocation5 + $0x980] sm:$0xff]
    %v358 = vld [vmem:[#allocation5 + $0x988] sm:$0xff]
    %v359 = vld [vmem:[#allocation5 + $0x990] sm:$0xff]
    %v360 = vld [vmem:[#allocation5 + $0x998] sm:$0xff]
    %v361 = vld [vmem:[#allocation5 + $0x9a0] sm:$0xff]
    %v362 = vld [vmem:[#allocation5 + $0x9a8] sm:$0xff]
    %v363 = vld [vmem:[#allocation5 + $0x9b0] sm:$0xff]
    %v364 = vld [vmem:[#allocation5 + $0x9b8] sm:$0xff]
    %v365 = vld [vmem:[#allocation5 + $0x9c0] sm:$0xff]
    %v366 = vld [vmem:[#allocation5 + $0x9c8] sm:$0xff]
    %v367 = vld [vmem:[#allocation5 + $0x9d0] sm:$0xff]
    %v368 = vld [vmem:[#allocation5 + $0x9d8] sm:$0xff]
    %v369 = vld [vmem:[#allocation5 + $0x9e0] sm:$0xff]
    %v370 = vld [vmem:[#allocation5 + $0x9e8] sm:$0xff]
    %v371 = vld [vmem:[#allocation5 + $0x9f0] sm:$0xff]
    %v372 = vld [vmem:[#allocation5 + $0x9f8] sm:$0xff]
    %v373 = vld [vmem:[#allocation5 + $0xa00] sm:$0xff]
    %v374 = vld [vmem:[#allocation5 + $0xa08] sm:$0xff]
    %v375 = vld [vmem:[#allocation5 + $0xa10] sm:$0xff]
    %v376 = vld [vmem:[#allocation5 + $0xa18] sm:$0xff]
    %v377 = vld [vmem:[#allocation5 + $0xa20] sm:$0xff]
    %v378 = vld [vmem:[#allocation5 + $0xa28] sm:$0xff]
    %v379 = vld [vmem:[#allocation5 + $0xa30] sm:$0xff]
    %v380 = vld [vmem:[#allocation5 + $0xa38] sm:$0xff]
    %v381 = vld [vmem:[#allocation5 + $0xa40] sm:$0xff]
    %v382 = vld [vmem:[#allocation5 + $0xa48] sm:$0xff]
    %v383 = vld [vmem:[#allocation5 + $0xa50] sm:$0xff]
    %v384 = vld [vmem:[#allocation5 + $0xa58] sm:$0xff]
    %v385 = vld [vmem:[#allocation5 + $0xa60] sm:$0xff]
    %v386 = vld [vmem:[#allocation5 + $0xa68] sm:$0xff]
    %v387 = vld [vmem:[#allocation5 + $0xa70] sm:$0xff]
    %v388 = vld [vmem:[#allocation5 + $0xa78] sm:$0xff]
    %v389 = vld [vmem:[#allocation5 + $0xa80] sm:$0xff]
    %v390 = vld [vmem:[#allocation5 + $0xa88] sm:$0xff]
    %v391 = vld [vmem:[#allocation5 + $0xa90] sm:$0xff]
    %v392 = vld [vmem:[#allocation5 + $0xa98] sm:$0xff]
    %v393 = vld [vmem:[#allocation5 + $0xaa0] sm:$0xff]
    %v394 = vld [vmem:[#allocation5 + $0xaa8] sm:$0xff]
    %v395 = vld [vmem:[#allocation5 + $0xab0] sm:$0xff]
    %v396 = vld [vmem:[#allocation5 + $0xab8] sm:$0xff]
    %v397 = vld [vmem:[#allocation5 + $0xac0] sm:$0xff]
    %v398 = vld [vmem:[#allocation5 + $0xac8] sm:$0xff]
    %v399 = vld [vmem:[#allocation5 + $0xad0] sm:$0xff]
    %v400 = vld [vmem:[#allocation5 + $0xad8] sm:$0xff]
    %v401 = vld [vmem:[#allocation5 + $0xae0] sm:$0xff]
    %v402 = vld [vmem:[#allocation5 + $0xae8] sm:$0xff]
    %v403 = vld [vmem:[#allocation5 + $0xaf0] sm:$0xff]
    %v404 = vld [vmem:[#allocation5 + $0xaf8] sm:$0xff]
    %v405 = vld [vmem:[#allocation5 + $0xb00] sm:$0xff]
    %v406 = vld [vmem:[#allocation5 + $0xb08] sm:$0xff]
    %v407 = vld [vmem:[#allocation5 + $0xb10] sm:$0xff]
    %v408 = vld [vmem:[#allocation5 + $0xb18] sm:$0xff]
    %v409 = vld [vmem:[#allocation5 + $0xb20] sm:$0xff]
    %v410 = vld [vmem:[#allocation5 + $0xb28] sm:$0xff]
    %v411 = vld [vmem:[#allocation5 + $0xb30] sm:$0xff]
    %v412 = vld [vmem:[#allocation5 + $0xb38] sm:$0xff]
    %v413 = vld [vmem:[#allocation5 + $0xb40] sm:$0xff]
    %v414 = vld [vmem:[#allocation5 + $0xb48] sm:$0xff]
    %v415 = vld [vmem:[#allocation5 + $0xb50] sm:$0xff]
    %v416 = vld [vmem:[#allocation5 + $0xb58] sm:$0xff]
    %v417 = vld [vmem:[#allocation5 + $0xb60] sm:$0xff]
    %v418 = vld [vmem:[#allocation5 + $0xb68] sm:$0xff]
    %v419 = vld [vmem:[#allocation5 + $0xb70] sm:$0xff]
    %v420 = vld [vmem:[#allocation5 + $0xb78] sm:$0xff]
    %v421 = vld [vmem:[#allocation5 + $0xb80] sm:$0xff]
    %v422 = vld [vmem:[#allocation5 + $0xb88] sm:$0xff]
    %v423 = vld [vmem:[#allocation5 + $0xb90] sm:$0xff]
    %v424 = vld [vmem:[#allocation5 + $0xb98] sm:$0xff]
    %v425 = vld [vmem:[#allocation5 + $0xba0] sm:$0xff]
    %v426 = vld [vmem:[#allocation5 + $0xba8] sm:$0xff]
    %v427 = vld [vmem:[#allocation5 + $0xbb0] sm:$0xff]
    %v428 = vld [vmem:[#allocation5 + $0xbb8] sm:$0xff]
    %v429 = vld [vmem:[#allocation5 + $0xbc0] sm:$0xff]
    %v430 = vld [vmem:[#allocation5 + $0xbc8] sm:$0xff]
    %v431 = vld [vmem:[#allocation5 + $0xbd0] sm:$0xff]
    %v432 = vld [vmem:[#allocation5 + $0xbd8] sm:$0xff]
    %v433 = vld [vmem:[#allocation5 + $0xbe0] sm:$0xff]
    %v434 = vld [vmem:[#allocation5 + $0xbe8] sm:$0xff]
    %v435 = vld [vmem:[#allocation5 + $0xbf0] sm:$0xff]
    %v436 = vld [vmem:[#allocation5 + $0xbf8] sm:$0xff]
    %v437 = vld [vmem:[#allocation5 + $0xc00] sm:$0xff]
    %v438 = vld [vmem:[#allocation5 + $0xc08] sm:$0xff]
    %v439 = vld [vmem:[#allocation5 + $0xc10] sm:$0xff]
    %v440 = vld [vmem:[#allocation5 + $0xc18] sm:$0xff]
    %v441 = vld [vmem:[#allocation5 + $0xc20] sm:$0xff]
    %v442 = vld [vmem:[#allocation5 + $0xc28] sm:$0xff]
    %v443 = vld [vmem:[#allocation5 + $0xc30] sm:$0xff]
    %v444 = vld [vmem:[#allocation5 + $0xc38] sm:$0xff]
    %v445 = vld [vmem:[#allocation5 + $0xc40] sm:$0xff]
    %v446 = vld [vmem:[#allocation5 + $0xc48] sm:$0xff]
    %v447 = vld [vmem:[#allocation5 + $0xc50] sm:$0xff]
    %v448 = vld [vmem:[#allocation5 + $0xc58] sm:$0xff]
    %v449 = vld [vmem:[#allocation5 + $0xc60] sm:$0xff]
    %v450 = vld [vmem:[#allocation5 + $0xc68] sm:$0xff]
    %v451 = vld [vmem:[#allocation5 + $0xc70] sm:$0xff]
    %v452 = vld [vmem:[#allocation5 + $0xc78] sm:$0xff]
    %v453 = vld [vmem:[#allocation5 + $0xc80] sm:$0xff]
    %v454 = vld [vmem:[#allocation5 + $0xc88] sm:$0xff]
    %v455 = vld [vmem:[#allocation5 + $0xc90] sm:$0xff]
    %v456 = vld [vmem:[#allocation5 + $0xc98] sm:$0xff]
    %v457 = vld [vmem:[#allocation5 + $0xca0] sm:$0xff]
    %v458 = vld [vmem:[#allocation5 + $0xca8] sm:$0xff]
    %v459 = vld [vmem:[#allocation5 + $0xcb0] sm:$0xff]
    %v460 = vld [vmem:[#allocation5 + $0xcb8] sm:$0xff]
    %v461 = vld [vmem:[#allocation5 + $0xcc0] sm:$0xff]
    %v462 = vld [vmem:[#allocation5 + $0xcc8] sm:$0xff]
    %v463 = vld [vmem:[#allocation5 + $0xcd0] sm:$0xff]
    %v464 = vld [vmem:[#allocation5 + $0xcd8] sm:$0xff]
    %v465 = vld [vmem:[#allocation5 + $0xce0] sm:$0xff]
    %v466 = vld [vmem:[#allocation5 + $0xce8] sm:$0xff]
    %v467 = vld [vmem:[#allocation5 + $0xcf0] sm:$0xff]
    %v468 = vld [vmem:[#allocation5 + $0xcf8] sm:$0xff]
    %v469 = vld [vmem:[#allocation5 + $0xd00] sm:$0xff]
    %v470 = vld [vmem:[#allocation5 + $0xd08] sm:$0xff]
    %v471 = vld [vmem:[#allocation5 + $0xd10] sm:$0xff]
    %v472 = vld [vmem:[#allocation5 + $0xd18] sm:$0xff]
    %v473 = vld [vmem:[#allocation5 + $0xd20] sm:$0xff]
    %v474 = vld [vmem:[#allocation5 + $0xd28] sm:$0xff]
    %v475 = vld [vmem:[#allocation5 + $0xd30] sm:$0xff]
    %v476 = vld [vmem:[#allocation5 + $0xd38] sm:$0xff]
    %v477 = vld [vmem:[#allocation5 + $0xd40] sm:$0xff]
    %v478 = vld [vmem:[#allocation5 + $0xd48] sm:$0xff]
    %v479 = vld [vmem:[#allocation5 + $0xd50] sm:$0xff]
    %v480 = vld [vmem:[#allocation5 + $0xd58] sm:$0xff]
    %v481 = vld [vmem:[#allocation5 + $0xd60] sm:$0xff]
    %v482 = vld [vmem:[#allocation5 + $0xd68] sm:$0xff]
    %v483 = vld [vmem:[#allocation5 + $0xd70] sm:$0xff]
    %v484 = vld [vmem:[#allocation5 + $0xd78] sm:$0xff]
    %v485 = vld [vmem:[#allocation5 + $0xd80] sm:$0xff]
    %v486 = vld [vmem:[#allocation5 + $0xd88] sm:$0xff]
    %v487 = vld [vmem:[#allocation5 + $0xd90] sm:$0xff]
    %v488 = vld [vmem:[#allocation5 + $0xd98] sm:$0xff]
    %v489 = vld [vmem:[#allocation5 + $0xda0] sm:$0xff]
    %v490 = vld [vmem:[#allocation5 + $0xda8] sm:$0xff]
    %v491 = vld [vmem:[#allocation5 + $0xdb0] sm:$0xff]
    %v492 = vld [vmem:[#allocation5 + $0xdb8] sm:$0xff]
    %v493 = vld [vmem:[#allocation5 + $0xdc0] sm:$0xff]
    %v494 = vld [vmem:[#allocation5 + $0xdc8] sm:$0xff]
    %v495 = vld [vmem:[#allocation5 + $0xdd0] sm:$0xff]
    %v496 = vld [vmem:[#allocation5 + $0xdd8] sm:$0xff]
    %v497 = vld [vmem:[#allocation5 + $0xde0] sm:$0xff]
    %v498 = vld [vmem:[#allocation5 + $0xde8] sm:$0xff]
    %v499 = vld [vmem:[#allocation5 + $0xdf0] sm:$0xff]
    %v500 = vld [vmem:[#allocation5 + $0xdf8] sm:$0xff]
    %v501 = vld [vmem:[#allocation5 + $0xe00] sm:$0xff]
    %v502 = vld [vmem:[#allocation5 + $0xe08] sm:$0xff]
    %v503 = vld [vmem:[#allocation5 + $0xe10] sm:$0xff]
    %v504 = vld [vmem:[#allocation5 + $0xe18] sm:$0xff]
    %v505 = vld [vmem:[#allocation5 + $0xe20] sm:$0xff]
    %v506 = vld [vmem:[#allocation5 + $0xe28] sm:$0xff]
    %v507 = vld [vmem:[#allocation5 + $0xe30] sm:$0xff]
    %v508 = vld [vmem:[#allocation5 + $0xe38] sm:$0xff]
    %v509 = vld [vmem:[#allocation5 + $0xe40] sm:$0xff]
    %v510 = vld [vmem:[#allocation5 + $0xe48] sm:$0xff]
    %v511 = vld [vmem:[#allocation5 + $0xe50] sm:$0xff]
    %v512 = vld [vmem:[#allocation5 + $0xe58] sm:$0xff]
    %v513 = vld [vmem:[#allocation5 + $0xe60] sm:$0xff]
    %v514 = vld [vmem:[#allocation5 + $0xe68] sm:$0xff]
    %v515 = vld [vmem:[#allocation5 + $0xe70] sm:$0xff]
    %v516 = vld [vmem:[#allocation5 + $0xe78] sm:$0xff]
    %v517 = vld [vmem:[#allocation5 + $0xe80] sm:$0xff]
    %v518 = vld [vmem:[#allocation5 + $0xe88] sm:$0xff]
    %v519 = vld [vmem:[#allocation5 + $0xe90] sm:$0xff]
    %v520 = vld [vmem:[#allocation5 + $0xe98] sm:$0xff]
    %v521 = vld [vmem:[#allocation5 + $0xea0] sm:$0xff]
    %v522 = vld [vmem:[#allocation5 + $0xea8] sm:$0xff]
    %v523 = vld [vmem:[#allocation5 + $0xeb0] sm:$0xff]
    %v524 = vld [vmem:[#allocation5 + $0xeb8] sm:$0xff]
    %v525 = vld [vmem:[#allocation5 + $0xec0] sm:$0xff]
    %v526 = vld [vmem:[#allocation5 + $0xec8] sm:$0xff]
    %v527 = vld [vmem:[#allocation5 + $0xed0] sm:$0xff]
    %v528 = vld [vmem:[#allocation5 + $0xed8] sm:$0xff]
    %v529 = vld [vmem:[#allocation5 + $0xee0] sm:$0xff]
    %v530 = vld [vmem:[#allocation5 + $0xee8] sm:$0xff]
    %v531 = vld [vmem:[#allocation5 + $0xef0] sm:$0xff]
    %v532 = vld [vmem:[#allocation5 + $0xef8] sm:$0xff]
    %v533 = vld [vmem:[#allocation5 + $0xf00] sm:$0xff]
    %v534 = vld [vmem:[#allocation5 + $0xf08] sm:$0xff]
    %v535 = vld [vmem:[#allocation5 + $0xf10] sm:$0xff]
    %v536 = vld [vmem:[#allocation5 + $0xf18] sm:$0xff]
    %v537 = vld [vmem:[#allocation5 + $0xf20] sm:$0xff]
    %v538 = vld [vmem:[#allocation5 + $0xf28] sm:$0xff]
    %v539 = vld [vmem:[#allocation5 + $0xf30] sm:$0xff]
    %v540 = vld [vmem:[#allocation5 + $0xf38] sm:$0xff]
    %v541 = vld [vmem:[#allocation5 + $0xf40] sm:$0xff]
    %v542 = vld [vmem:[#allocation5 + $0xf48] sm:$0xff]
    %v543 = vld [vmem:[#allocation5 + $0xf50] sm:$0xff]
    %v544 = vld [vmem:[#allocation5 + $0xf58] sm:$0xff]
    %v545 = vld [vmem:[#allocation5 + $0xf60] sm:$0xff]
    %v546 = vld [vmem:[#allocation5 + $0xf68] sm:$0xff]
    %v547 = vld [vmem:[#allocation5 + $0xf70] sm:$0xff]
    %v548 = vld [vmem:[#allocation5 + $0xf78] sm:$0xff]
    %v549 = vld [vmem:[#allocation5 + $0xf80] sm:$0xff]
    %v550 = vld [vmem:[#allocation5 + $0xf88] sm:$0xff]
    %v551 = vld [vmem:[#allocation5 + $0xf90] sm:$0xff]
    %v552 = vld [vmem:[#allocation5 + $0xf98] sm:$0xff]
    %v553 = vld [vmem:[#allocation5 + $0xfa0] sm:$0xff]
    %v554 = vld [vmem:[#allocation5 + $0xfa8] sm:$0xff]
    %v555 = vld [vmem:[#allocation5 + $0xfb0] sm:$0xff]
    %v556 = vld [vmem:[#allocation5 + $0xfb8] sm:$0xff]
    %v557 = vld [vmem:[#allocation5 + $0xfc0] sm:$0xff]
    %v558 = vld [vmem:[#allocation5 + $0xfc8] sm:$0xff]
    %v559 = vld [vmem:[#allocation5 + $0xfd0] sm:$0xff]
    %v560 = vld [vmem:[#allocation5 + $0xfd8] sm:$0xff]
    %v561 = vld [vmem:[#allocation5 + $0xfe0] sm:$0xff]
    %v562 = vld [vmem:[#allocation5 + $0xfe8] sm:$0xff]
    %v563 = vld [vmem:[#allocation5 + $0xff0] sm:$0xff]
    %v564 = vld [vmem:[#allocation5 + $0xff8] sm:$0xff]
    %v565 = vld [vmem:[#allocation7] sm:$0xff]
    %v567 = vlaneseq
    %v568 = vshrl.u32 %v567, 7
    %v569 = vsub.s32 0, %v568
    %v570 = vrot.slane %v565, %v569
    %v571 = vlaneseq
    %v572 = vshrl.u32 %v571, 7
    %v573 = vsub.s32 1, %v572
    %v574 = vrot.slane %v565, %v573
    %v575 = vlaneseq
    %v576 = vshrl.u32 %v575, 7
    %v577 = vsub.s32 2, %v576
    %v578 = vrot.slane %v565, %v577
    %v579 = vlaneseq
    %v580 = vshrl.u32 %v579, 7
    %v581 = vsub.s32 3, %v580
    %v582 = vrot.slane %v565, %v581
    %v583 = vlaneseq
    %v584 = vshrl.u32 %v583, 7
    %v585 = vsub.s32 4, %v584
    %v586 = vrot.slane %v565, %v585
    %v587 = vlaneseq
    %v588 = vshrl.u32 %v587, 7
    %v589 = vsub.s32 5, %v588
    %v590 = vrot.slane %v565, %v589
    %v591 = vlaneseq
    %v592 = vshrl.u32 %v591, 7
    %v593 = vsub.s32 6, %v592
    %v594 = vrot.slane %v565, %v593
    %v595 = vlaneseq
    %v596 = vshrl.u32 %v595, 7
    %v597 = vsub.s32 7, %v596
    %v598 = vrot.slane %v565, %v597
    %v608 = vcombine.high %v52, %v52
    %v610 = vunpack.c.l.s4 1983009808
    %v611 = vunpack.c.0.s8 %v610
    %v612 = vlaneseq
    %v613 = vshrl.u32 %v612, 7
    %v614 = vsub.s32 %v611, %v613
    %v615 = vrot.slane %v52, %v614
    %v617 = vunpack.c.l.s4 1983009808
    %v618 = vunpack.c.0.s8 %v617
    %v619 = vlaneseq
    %v620 = vshrl.u32 %v619, 7
    %v621 = vsub.s32 %v618, %v620
    %v622 = vrot.slane %v608, %v621
    %v623 = vcombine.high %v615, %v615
    %v624 = vcombine.high %v622, %v622
    %629 = vmatprep.subr.mxu0 %v174
    %630 = vmatpush1.msra.mxu0 %v173
    %631 = vmatprep.subr.mxu0 %v166
    %632 = vmatpush1.msra.mxu0 %v165
    %633 = vmatprep.subr.mxu0 %v158
    %634 = vmatpush1.msra.mxu0 %v157
    %635 = vmatprep.subr.mxu0 %v150
    %636 = vmatpush1.msra.mxu0 %v149
    %637 = vmatprep.subr.mxu0 %v142
    %638 = vmatpush1.msra.mxu0 %v141
    %639 = vmatprep.subr.mxu0 %v134
    %640 = vmatpush1.msra.mxu0 %v133
    %641 = vmatprep.subr.mxu0 %v126
    %642 = vmatpush1.msra.mxu0 %v125
    %643 = vmatprep.subr.mxu0 %v118
    %644 = vmatpush1.msra.mxu0 %v117
    %645 = vmatprep.subr.mxu0 %v110
    %646 = vmatpush1.msra.mxu0 %v109
    %647 = vmatprep.subr.mxu0 %v102
    %648 = vmatpush1.msra.mxu0 %v101
    %649 = vmatprep.subr.mxu0 %v94
    %650 = vmatpush1.msra.mxu0 %v93
    %651 = vmatprep.subr.mxu0 %v86
    %652 = vmatpush1.msra.mxu0 %v85
    %653 = vmatprep.subr.mxu0 %v78
    %654 = vmatpush1.msra.mxu0 %v77
    %655 = vmatprep.subr.mxu0 %v70
    %656 = vmatpush1.msra.mxu0 %v69
    %657 = vmatprep.subr.mxu0 %v62
    %658 = vmatpush1.msra.mxu0 %v61
    %659 = vmatprep.subr.mxu0 %v54
    %660 = vmatpush1.msra.mxu0 %v53
    %661 = vmatprep.subr.mxu0 %v302
    %662 = vmatpush2.msra.mxu0 %v301
    %663 = vmatprep.subr.mxu0 %v294
    %664 = vmatpush2.msra.mxu0 %v293
    %665 = vmatprep.subr.mxu0 %v286
    %666 = vmatpush2.msra.mxu0 %v285
    %667 = vmatprep.subr.mxu0 %v278
    %668 = vmatpush2.msra.mxu0 %v277
    %669 = vmatprep.subr.mxu0 %v270
    %670 = vmatpush2.msra.mxu0 %v269
    %671 = vmatprep.subr.mxu0 %v262
    %672 = vmatpush2.msra.mxu0 %v261
    %673 = vmatprep.subr.mxu0 %v254
    %674 = vmatpush2.msra.mxu0 %v253
    %675 = vmatprep.subr.mxu0 %v246
    %676 = vmatpush2.msra.mxu0 %v245
    %677 = vmatprep.subr.mxu0 %v238
    %678 = vmatpush2.msra.mxu0 %v237
    %679 = vmatprep.subr.mxu0 %v230
    %680 = vmatpush2.msra.mxu0 %v229
    %681 = vmatprep.subr.mxu0 %v222
    %682 = vmatpush2.msra.mxu0 %v221
    %683 = vmatprep.subr.mxu0 %v214
    %684 = vmatpush2.msra.mxu0 %v213
    %685 = vmatprep.subr.mxu0 %v206
    %686 = vmatpush2.msra.mxu0 %v205
    %687 = vmatprep.subr.mxu0 %v198
    %688 = vmatpush2.msra.mxu0 %v197
    %689 = vmatprep.subr.mxu0 %v190
    %690 = vmatpush2.msra.mxu0 %v189
    %691 = vmatprep.subr.mxu0 %v182
    %692 = vmatpush2.msra.mxu0 %v181
    %693 = vmatprep.mubr.f32.mxu0 %v623
    %694 = vmatmul.mubr.f32.gmra.mxu0 %v615
    %v695 = vpop.f32.mrf.mxu0
    %v696 = vadd.f32 %v570, %v695
    %v697 = vpop.f32.mrf.mxu0
    %v698 = vadd.f32 %v574, %v697
    %699 = vdwg.mxu0
    %700 = vmatprep.subr.mxu0 %v430
    %701 = vmatpush1.msra.mxu0 %v429
    %702 = vmatprep.subr.mxu0 %v422
    %703 = vmatpush1.msra.mxu0 %v421
    %704 = vmatprep.subr.mxu0 %v414
    %705 = vmatpush1.msra.mxu0 %v413
    %706 = vmatprep.subr.mxu0 %v406
    %707 = vmatpush1.msra.mxu0 %v405
    %708 = vmatprep.subr.mxu0 %v398
    %709 = vmatpush1.msra.mxu0 %v397
    %710 = vmatprep.subr.mxu0 %v390
    %711 = vmatpush1.msra.mxu0 %v389
    %712 = vmatprep.subr.mxu0 %v382
    %713 = vmatpush1.msra.mxu0 %v381
    %714 = vmatprep.subr.mxu0 %v374
    %715 = vmatpush1.msra.mxu0 %v373
    %716 = vmatprep.subr.mxu0 %v366
    %717 = vmatpush1.msra.mxu0 %v365
    %718 = vmatprep.subr.mxu0 %v358
    %719 = vmatpush1.msra.mxu0 %v357
    %720 = vmatprep.subr.mxu0 %v350
    %721 = vmatpush1.msra.mxu0 %v349
    %722 = vmatprep.subr.mxu0 %v342
    %723 = vmatpush1.msra.mxu0 %v341
    %724 = vmatprep.subr.mxu0 %v334
    %725 = vmatpush1.msra.mxu0 %v333
    %726 = vmatprep.subr.mxu0 %v326
    %727 = vmatpush1.msra.mxu0 %v325
    %728 = vmatprep.subr.mxu0 %v318
    %729 = vmatpush1.msra.mxu0 %v317
    %730 = vmatprep.subr.mxu0 %v310
    %731 = vmatpush1.msra.mxu0 %v309
    %732 = vmatprep.subr.mxu0 %v558
    %733 = vmatpush2.msra.mxu0 %v557
    %734 = vmatprep.subr.mxu0 %v550
    %735 = vmatpush2.msra.mxu0 %v549
    %736 = vmatprep.subr.mxu0 %v542
    %737 = vmatpush2.msra.mxu0 %v541
    %738 = vmatprep.subr.mxu0 %v534
    %739 = vmatpush2.msra.mxu0 %v533
    %740 = vmatprep.subr.mxu0 %v526
    %741 = vmatpush2.msra.mxu0 %v525
    %742 = vmatprep.subr.mxu0 %v518
    %743 = vmatpush2.msra.mxu0 %v517
    %744 = vmatprep.subr.mxu0 %v510
    %745 = vmatpush2.msra.mxu0 %v509
    %746 = vmatprep.subr.mxu0 %v502
    %747 = vmatpush2.msra.mxu0 %v501
    %748 = vmatprep.subr.mxu0 %v494
    %749 = vmatpush2.msra.mxu0 %v493
    %750 = vmatprep.subr.mxu0 %v486
    %751 = vmatpush2.msra.mxu0 %v485
    %752 = vmatprep.subr.mxu0 %v478
    %753 = vmatpush2.msra.mxu0 %v477
    %754 = vmatprep.subr.mxu0 %v470
    %755 = vmatpush2.msra.mxu0 %v469
    %756 = vmatprep.subr.mxu0 %v462
    %757 = vmatpush2.msra.mxu0 %v461
    %758 = vmatprep.subr.mxu0 %v454
    %759 = vmatpush2.msra.mxu0 %v453
    %760 = vmatprep.subr.mxu0 %v446
    %761 = vmatpush2.msra.mxu0 %v445
    %762 = vmatprep.subr.mxu0 %v438
    %763 = vmatpush2.msra.mxu0 %v437
    %764 = vmatprep.mubr.f32.mxu0 %v624
    %765 = vmatmul.mubr.f32.gmra.mxu0 %v622
    %v766 = vpop.f32.mrf.mxu0
    %v767 = vadd.f32 %v696, %v766
    %v768 = vpop.f32.mrf.mxu0
    %v769 = vadd.f32 %v698, %v768
    %770 = vdwg.mxu0
    %771 = vmatprep.subr.mxu0 %v176
    %772 = vmatpush1.msra.mxu0 %v175
    %773 = vmatprep.subr.mxu0 %v168
    %774 = vmatpush1.msra.mxu0 %v167
    %775 = vmatprep.subr.mxu0 %v160
    %776 = vmatpush1.msra.mxu0 %v159
    %777 = vmatprep.subr.mxu0 %v152
    %778 = vmatpush1.msra.mxu0 %v151
    %779 = vmatprep.subr.mxu0 %v144
    %780 = vmatpush1.msra.mxu0 %v143
    %781 = vmatprep.subr.mxu0 %v136
    %782 = vmatpush1.msra.mxu0 %v135
    %783 = vmatprep.subr.mxu0 %v128
    %784 = vmatpush1.msra.mxu0 %v127
    %785 = vmatprep.subr.mxu0 %v120
    %786 = vmatpush1.msra.mxu0 %v119
    %787 = vmatprep.subr.mxu0 %v112
    %788 = vmatpush1.msra.mxu0 %v111
    %789 = vmatprep.subr.mxu0 %v104
    %790 = vmatpush1.msra.mxu0 %v103
    %791 = vmatprep.subr.mxu0 %v96
    %792 = vmatpush1.msra.mxu0 %v95
    %793 = vmatprep.subr.mxu0 %v88
    %794 = vmatpush1.msra.mxu0 %v87
    %795 = vmatprep.subr.mxu0 %v80
    %796 = vmatpush1.msra.mxu0 %v79
    %797 = vmatprep.subr.mxu0 %v72
    %798 = vmatpush1.msra.mxu0 %v71
    %799 = vmatprep.subr.mxu0 %v64
    %800 = vmatpush1.msra.mxu0 %v63
    %801 = vmatprep.subr.mxu0 %v56
    %802 = vmatpush1.msra.mxu0 %v55
    %803 = vmatprep.subr.mxu0 %v304
    %804 = vmatpush2.msra.mxu0 %v303
    %805 = vmatprep.subr.mxu0 %v296
    %806 = vmatpush2.msra.mxu0 %v295
    %807 = vmatprep.subr.mxu0 %v288
    %808 = vmatpush2.msra.mxu0 %v287
    %809 = vmatprep.subr.mxu0 %v280
    %810 = vmatpush2.msra.mxu0 %v279
    %811 = vmatprep.subr.mxu0 %v272
    %812 = vmatpush2.msra.mxu0 %v271
    %813 = vmatprep.subr.mxu0 %v264
    %814 = vmatpush2.msra.mxu0 %v263
    %815 = vmatprep.subr.mxu0 %v256
    %816 = vmatpush2.msra.mxu0 %v255
    %817 = vmatprep.subr.mxu0 %v248
    %818 = vmatpush2.msra.mxu0 %v247
    %819 = vmatprep.subr.mxu0 %v240
    %820 = vmatpush2.msra.mxu0 %v239
    %821 = vmatprep.subr.mxu0 %v232
    %822 = vmatpush2.msra.mxu0 %v231
    %823 = vmatprep.subr.mxu0 %v224
    %824 = vmatpush2.msra.mxu0 %v223
    %825 = vmatprep.subr.mxu0 %v216
    %826 = vmatpush2.msra.mxu0 %v215
    %827 = vmatprep.subr.mxu0 %v208
    %828 = vmatpush2.msra.mxu0 %v207
    %829 = vmatprep.subr.mxu0 %v200
    %830 = vmatpush2.msra.mxu0 %v199
    %831 = vmatprep.subr.mxu0 %v192
    %832 = vmatpush2.msra.mxu0 %v191
    %833 = vmatprep.subr.mxu0 %v184
    %834 = vmatpush2.msra.mxu0 %v183
    %835 = vmatprep.mubr.f32.mxu0 %v623
    %836 = vmatmul.mubr.f32.gmra.mxu0 %v615
    %v837 = vpop.f32.mrf.mxu0
    %v838 = vadd.f32 %v578, %v837
    %v839 = vpop.f32.mrf.mxu0
    %v840 = vadd.f32 %v582, %v839
    %841 = vdwg.mxu0
    %842 = vmatprep.subr.mxu0 %v432
    %843 = vmatpush1.msra.mxu0 %v431
    %844 = vmatprep.subr.mxu0 %v424
    %845 = vmatpush1.msra.mxu0 %v423
    %846 = vmatprep.subr.mxu0 %v416
    %847 = vmatpush1.msra.mxu0 %v415
    %848 = vmatprep.subr.mxu0 %v408
    %849 = vmatpush1.msra.mxu0 %v407
    %850 = vmatprep.subr.mxu0 %v400
    %851 = vmatpush1.msra.mxu0 %v399
    %852 = vmatprep.subr.mxu0 %v392
    %853 = vmatpush1.msra.mxu0 %v391
    %854 = vmatprep.subr.mxu0 %v384
    %855 = vmatpush1.msra.mxu0 %v383
    %856 = vmatprep.subr.mxu0 %v376
    %857 = vmatpush1.msra.mxu0 %v375
    %858 = vmatprep.subr.mxu0 %v368
    %859 = vmatpush1.msra.mxu0 %v367
    %860 = vmatprep.subr.mxu0 %v360
    %861 = vmatpush1.msra.mxu0 %v359
    %862 = vmatprep.subr.mxu0 %v352
    %863 = vmatpush1.msra.mxu0 %v351
    %864 = vmatprep.subr.mxu0 %v344
    %865 = vmatpush1.msra.mxu0 %v343
    %866 = vmatprep.subr.mxu0 %v336
    %867 = vmatpush1.msra.mxu0 %v335
    %868 = vmatprep.subr.mxu0 %v328
    %869 = vmatpush1.msra.mxu0 %v327
    %870 = vmatprep.subr.mxu0 %v320
    %871 = vmatpush1.msra.mxu0 %v319
    %872 = vmatprep.subr.mxu0 %v312
    %873 = vmatpush1.msra.mxu0 %v311
    %874 = vmatprep.subr.mxu0 %v560
    %875 = vmatpush2.msra.mxu0 %v559
    %876 = vmatprep.subr.mxu0 %v552
    %877 = vmatpush2.msra.mxu0 %v551
    %878 = vmatprep.subr.mxu0 %v544
    %879 = vmatpush2.msra.mxu0 %v543
    %880 = vmatprep.subr.mxu0 %v536
    %881 = vmatpush2.msra.mxu0 %v535
    %882 = vmatprep.subr.mxu0 %v528
    %883 = vmatpush2.msra.mxu0 %v527
    %884 = vmatprep.subr.mxu0 %v520
    %885 = vmatpush2.msra.mxu0 %v519
    %886 = vmatprep.subr.mxu0 %v512
    %887 = vmatpush2.msra.mxu0 %v511
    %888 = vmatprep.subr.mxu0 %v504
    %889 = vmatpush2.msra.mxu0 %v503
    %890 = vmatprep.subr.mxu0 %v496
    %891 = vmatpush2.msra.mxu0 %v495
    %892 = vmatprep.subr.mxu0 %v488
    %893 = vmatpush2.msra.mxu0 %v487
    %894 = vmatprep.subr.mxu0 %v480
    %895 = vmatpush2.msra.mxu0 %v479
    %896 = vmatprep.subr.mxu0 %v472
    %897 = vmatpush2.msra.mxu0 %v471
    %898 = vmatprep.subr.mxu0 %v464
    %899 = vmatpush2.msra.mxu0 %v463
    %900 = vmatprep.subr.mxu0 %v456
    %901 = vmatpush2.msra.mxu0 %v455
    %902 = vmatprep.subr.mxu0 %v448
    %903 = vmatpush2.msra.mxu0 %v447
    %904 = vmatprep.subr.mxu0 %v440
    %905 = vmatpush2.msra.mxu0 %v439
    %906 = vmatprep.mubr.f32.mxu0 %v624
    %907 = vmatmul.mubr.f32.gmra.mxu0 %v622
    %v908 = vpop.f32.mrf.mxu0
    %v909 = vadd.f32 %v838, %v908
    %v910 = vpop.f32.mrf.mxu0
    %v911 = vadd.f32 %v840, %v910
    %912 = vdwg.mxu0
    %913 = vmatprep.subr.mxu0 %v178
    %914 = vmatpush1.msra.mxu0 %v177
    %915 = vmatprep.subr.mxu0 %v170
    %916 = vmatpush1.msra.mxu0 %v169
    %917 = vmatprep.subr.mxu0 %v162
    %918 = vmatpush1.msra.mxu0 %v161
    %919 = vmatprep.subr.mxu0 %v154
    %920 = vmatpush1.msra.mxu0 %v153
    %921 = vmatprep.subr.mxu0 %v146
    %922 = vmatpush1.msra.mxu0 %v145
    %923 = vmatprep.subr.mxu0 %v138
    %924 = vmatpush1.msra.mxu0 %v137
    %925 = vmatprep.subr.mxu0 %v130
    %926 = vmatpush1.msra.mxu0 %v129
    %927 = vmatprep.subr.mxu0 %v122
    %928 = vmatpush1.msra.mxu0 %v121
    %929 = vmatprep.subr.mxu0 %v114
    %930 = vmatpush1.msra.mxu0 %v113
    %931 = vmatprep.subr.mxu0 %v106
    %932 = vmatpush1.msra.mxu0 %v105
    %933 = vmatprep.subr.mxu0 %v98
    %934 = vmatpush1.msra.mxu0 %v97
    %935 = vmatprep.subr.mxu0 %v90
    %936 = vmatpush1.msra.mxu0 %v89
    %937 = vmatprep.subr.mxu0 %v82
    %938 = vmatpush1.msra.mxu0 %v81
    %939 = vmatprep.subr.mxu0 %v74
    %940 = vmatpush1.msra.mxu0 %v73
    %941 = vmatprep.subr.mxu0 %v66
    %942 = vmatpush1.msra.mxu0 %v65
    %943 = vmatprep.subr.mxu0 %v58
    %944 = vmatpush1.msra.mxu0 %v57
    %945 = vmatprep.subr.mxu0 %v306
    %946 = vmatpush2.msra.mxu0 %v305
    %947 = vmatprep.subr.mxu0 %v298
    %948 = vmatpush2.msra.mxu0 %v297
    %949 = vmatprep.subr.mxu0 %v290
    %950 = vmatpush2.msra.mxu0 %v289
    %951 = vmatprep.subr.mxu0 %v282
    %952 = vmatpush2.msra.mxu0 %v281
    %953 = vmatprep.subr.mxu0 %v274
    %954 = vmatpush2.msra.mxu0 %v273
    %955 = vmatprep.subr.mxu0 %v266
    %956 = vmatpush2.msra.mxu0 %v265
    %957 = vmatprep.subr.mxu0 %v258
    %958 = vmatpush2.msra.mxu0 %v257
    %959 = vmatprep.subr.mxu0 %v250
    %960 = vmatpush2.msra.mxu0 %v249
    %961 = vmatprep.subr.mxu0 %v242
    %962 = vmatpush2.msra.mxu0 %v241
    %963 = vmatprep.subr.mxu0 %v234
    %964 = vmatpush2.msra.mxu0 %v233
    %965 = vmatprep.subr.mxu0 %v226
    %966 = vmatpush2.msra.mxu0 %v225
    %967 = vmatprep.subr.mxu0 %v218
    %968 = vmatpush2.msra.mxu0 %v217
    %969 = vmatprep.subr.mxu0 %v210
    %970 = vmatpush2.msra.mxu0 %v209
    %971 = vmatprep.subr.mxu0 %v202
    %972 = vmatpush2.msra.mxu0 %v201
    %973 = vmatprep.subr.mxu0 %v194
    %974 = vmatpush2.msra.mxu0 %v193
    %975 = vmatprep.subr.mxu0 %v186
    %976 = vmatpush2.msra.mxu0 %v185
    %977 = vmatprep.mubr.f32.mxu0 %v623
    %978 = vmatmul.mubr.f32.gmra.mxu0 %v615
    %v979 = vpop.f32.mrf.mxu0
    %v980 = vadd.f32 %v586, %v979
    %v981 = vpop.f32.mrf.mxu0
    %v982 = vadd.f32 %v590, %v981
    %983 = vdwg.mxu0
    %984 = vmatprep.subr.mxu0 %v434
    %985 = vmatpush1.msra.mxu0 %v433
    %986 = vmatprep.subr.mxu0 %v426
    %987 = vmatpush1.msra.mxu0 %v425
    %988 = vmatprep.subr.mxu0 %v418
    %989 = vmatpush1.msra.mxu0 %v417
    %990 = vmatprep.subr.mxu0 %v410
    %991 = vmatpush1.msra.mxu0 %v409
    %992 = vmatprep.subr.mxu0 %v402
    %993 = vmatpush1.msra.mxu0 %v401
    %994 = vmatprep.subr.mxu0 %v394
    %995 = vmatpush1.msra.mxu0 %v393
    %996 = vmatprep.subr.mxu0 %v386
    %997 = vmatpush1.msra.mxu0 %v385
    %998 = vmatprep.subr.mxu0 %v378
    %999 = vmatpush1.msra.mxu0 %v377
    %1000 = vmatprep.subr.mxu0 %v370
    %1001 = vmatpush1.msra.mxu0 %v369
    %1002 = vmatprep.subr.mxu0 %v362
    %1003 = vmatpush1.msra.mxu0 %v361
    %1004 = vmatprep.subr.mxu0 %v354
    %1005 = vmatpush1.msra.mxu0 %v353
    %1006 = vmatprep.subr.mxu0 %v346
    %1007 = vmatpush1.msra.mxu0 %v345
    %1008 = vmatprep.subr.mxu0 %v338
    %1009 = vmatpush1.msra.mxu0 %v337
    %1010 = vmatprep.subr.mxu0 %v330
    %1011 = vmatpush1.msra.mxu0 %v329
    %1012 = vmatprep.subr.mxu0 %v322
    %1013 = vmatpush1.msra.mxu0 %v321
    %1014 = vmatprep.subr.mxu0 %v314
    %1015 = vmatpush1.msra.mxu0 %v313
    %1016 = vmatprep.subr.mxu0 %v562
    %1017 = vmatpush2.msra.mxu0 %v561
    %1018 = vmatprep.subr.mxu0 %v554
    %1019 = vmatpush2.msra.mxu0 %v553
    %1020 = vmatprep.subr.mxu0 %v546
    %1021 = vmatpush2.msra.mxu0 %v545
    %1022 = vmatprep.subr.mxu0 %v538
    %1023 = vmatpush2.msra.mxu0 %v537
    %1024 = vmatprep.subr.mxu0 %v530
    %1025 = vmatpush2.msra.mxu0 %v529
    %1026 = vmatprep.subr.mxu0 %v522
    %1027 = vmatpush2.msra.mxu0 %v521
    %1028 = vmatprep.subr.mxu0 %v514
    %1029 = vmatpush2.msra.mxu0 %v513
    %1030 = vmatprep.subr.mxu0 %v506
    %1031 = vmatpush2.msra.mxu0 %v505
    %1032 = vmatprep.subr.mxu0 %v498
    %1033 = vmatpush2.msra.mxu0 %v497
    %1034 = vmatprep.subr.mxu0 %v490
    %1035 = vmatpush2.msra.mxu0 %v489
    %1036 = vmatprep.subr.mxu0 %v482
    %1037 = vmatpush2.msra.mxu0 %v481
    %1038 = vmatprep.subr.mxu0 %v474
    %1039 = vmatpush2.msra.mxu0 %v473
    %1040 = vmatprep.subr.mxu0 %v466
    %1041 = vmatpush2.msra.mxu0 %v465
    %1042 = vmatprep.subr.mxu0 %v458
    %1043 = vmatpush2.msra.mxu0 %v457
    %1044 = vmatprep.subr.mxu0 %v450
    %1045 = vmatpush2.msra.mxu0 %v449
    %1046 = vmatprep.subr.mxu0 %v442
    %1047 = vmatpush2.msra.mxu0 %v441
    %1048 = vmatprep.mubr.f32.mxu0 %v624
    %1049 = vmatmul.mubr.f32.gmra.mxu0 %v622
    %v1050 = vpop.f32.mrf.mxu0
    %v1051 = vadd.f32 %v980, %v1050
    %v1052 = vpop.f32.mrf.mxu0
    %v1053 = vadd.f32 %v982, %v1052
    %1054 = vdwg.mxu0
    %1055 = vmatprep.subr.mxu0 %v180
    %1056 = vmatpush1.msra.mxu0 %v179
    %1057 = vmatprep.subr.mxu0 %v172
    %1058 = vmatpush1.msra.mxu0 %v171
    %1059 = vmatprep.subr.mxu0 %v164
    %1060 = vmatpush1.msra.mxu0 %v163
    %1061 = vmatprep.subr.mxu0 %v156
    %1062 = vmatpush1.msra.mxu0 %v155
    %1063 = vmatprep.subr.mxu0 %v148
    %1064 = vmatpush1.msra.mxu0 %v147
    %1065 = vmatprep.subr.mxu0 %v140
    %1066 = vmatpush1.msra.mxu0 %v139
    %1067 = vmatprep.subr.mxu0 %v132
    %1068 = vmatpush1.msra.mxu0 %v131
    %1069 = vmatprep.subr.mxu0 %v124
    %1070 = vmatpush1.msra.mxu0 %v123
    %1071 = vmatprep.subr.mxu0 %v116
    %1072 = vmatpush1.msra.mxu0 %v115
    %1073 = vmatprep.subr.mxu0 %v108
    %1074 = vmatpush1.msra.mxu0 %v107
    %1075 = vmatprep.subr.mxu0 %v100
    %1076 = vmatpush1.msra.mxu0 %v99
    %1077 = vmatprep.subr.mxu0 %v92
    %1078 = vmatpush1.msra.mxu0 %v91
    %1079 = vmatprep.subr.mxu0 %v84
    %1080 = vmatpush1.msra.mxu0 %v83
    %1081 = vmatprep.subr.mxu0 %v76
    %1082 = vmatpush1.msra.mxu0 %v75
    %1083 = vmatprep.subr.mxu0 %v68
    %1084 = vmatpush1.msra.mxu0 %v67
    %1085 = vmatprep.subr.mxu0 %v60
    %1086 = vmatpush1.msra.mxu0 %v59
    %1087 = vmatprep.subr.mxu0 %v308
    %1088 = vmatpush2.msra.mxu0 %v307
    %1089 = vmatprep.subr.mxu0 %v300
    %1090 = vmatpush2.msra.mxu0 %v299
    %1091 = vmatprep.subr.mxu0 %v292
    %1092 = vmatpush2.msra.mxu0 %v291
    %1093 = vmatprep.subr.mxu0 %v284
    %1094 = vmatpush2.msra.mxu0 %v283
    %1095 = vmatprep.subr.mxu0 %v276
    %1096 = vmatpush2.msra.mxu0 %v275
    %1097 = vmatprep.subr.mxu0 %v268
    %1098 = vmatpush2.msra.mxu0 %v267
    %1099 = vmatprep.subr.mxu0 %v260
    %1100 = vmatpush2.msra.mxu0 %v259
    %1101 = vmatprep.subr.mxu0 %v252
    %1102 = vmatpush2.msra.mxu0 %v251
    %1103 = vmatprep.subr.mxu0 %v244
    %1104 = vmatpush2.msra.mxu0 %v243
    %1105 = vmatprep.subr.mxu0 %v236
    %1106 = vmatpush2.msra.mxu0 %v235
    %1107 = vmatprep.subr.mxu0 %v228
    %1108 = vmatpush2.msra.mxu0 %v227
    %1109 = vmatprep.subr.mxu0 %v220
    %1110 = vmatpush2.msra.mxu0 %v219
    %1111 = vmatprep.subr.mxu0 %v212
    %1112 = vmatpush2.msra.mxu0 %v211
    %1113 = vmatprep.subr.mxu0 %v204
    %1114 = vmatpush2.msra.mxu0 %v203
    %1115 = vmatprep.subr.mxu0 %v196
    %1116 = vmatpush2.msra.mxu0 %v195
    %1117 = vmatprep.subr.mxu0 %v188
    %1118 = vmatpush2.msra.mxu0 %v187
    %1119 = vmatprep.mubr.f32.mxu0 %v623
    %1120 = vmatmul.mubr.f32.gmra.mxu0 %v615
    %v1121 = vpop.f32.mrf.mxu0
    %v1122 = vadd.f32 %v594, %v1121
    %v1123 = vpop.f32.mrf.mxu0
    %v1124 = vadd.f32 %v598, %v1123
    %1125 = vdwg.mxu0
    %1126 = vmatprep.subr.mxu0 %v436
    %1127 = vmatpush1.msra.mxu0 %v435
    %1128 = vmatprep.subr.mxu0 %v428
    %1129 = vmatpush1.msra.mxu0 %v427
    %1130 = vmatprep.subr.mxu0 %v420
    %1131 = vmatpush1.msra.mxu0 %v419
    %1132 = vmatprep.subr.mxu0 %v412
    %1133 = vmatpush1.msra.mxu0 %v411
    %1134 = vmatprep.subr.mxu0 %v404
    %1135 = vmatpush1.msra.mxu0 %v403
    %1136 = vmatprep.subr.mxu0 %v396
    %1137 = vmatpush1.msra.mxu0 %v395
    %1138 = vmatprep.subr.mxu0 %v388
    %1139 = vmatpush1.msra.mxu0 %v387
    %1140 = vmatprep.subr.mxu0 %v380
    %1141 = vmatpush1.msra.mxu0 %v379
    %1142 = vmatprep.subr.mxu0 %v372
    %1143 = vmatpush1.msra.mxu0 %v371
    %1144 = vmatprep.subr.mxu0 %v364
    %1145 = vmatpush1.msra.mxu0 %v363
    %1146 = vmatprep.subr.mxu0 %v356
    %1147 = vmatpush1.msra.mxu0 %v355
    %1148 = vmatprep.subr.mxu0 %v348
    %1149 = vmatpush1.msra.mxu0 %v347
    %1150 = vmatprep.subr.mxu0 %v340
    %1151 = vmatpush1.msra.mxu0 %v339
    %1152 = vmatprep.subr.mxu0 %v332
    %1153 = vmatpush1.msra.mxu0 %v331
    %1154 = vmatprep.subr.mxu0 %v324
    %1155 = vmatpush1.msra.mxu0 %v323
    %1156 = vmatprep.subr.mxu0 %v316
    %1157 = vmatpush1.msra.mxu0 %v315
    %1158 = vmatprep.subr.mxu0 %v564
    %1159 = vmatpush2.msra.mxu0 %v563
    %1160 = vmatprep.subr.mxu0 %v556
    %1161 = vmatpush2.msra.mxu0 %v555
    %1162 = vmatprep.subr.mxu0 %v548
    %1163 = vmatpush2.msra.mxu0 %v547
    %1164 = vmatprep.subr.mxu0 %v540
    %1165 = vmatpush2.msra.mxu0 %v539
    %1166 = vmatprep.subr.mxu0 %v532
    %1167 = vmatpush2.msra.mxu0 %v531
    %1168 = vmatprep.subr.mxu0 %v524
    %1169 = vmatpush2.msra.mxu0 %v523
    %1170 = vmatprep.subr.mxu0 %v516
    %1171 = vmatpush2.msra.mxu0 %v515
    %1172 = vmatprep.subr.mxu0 %v508
    %1173 = vmatpush2.msra.mxu0 %v507
    %1174 = vmatprep.subr.mxu0 %v500
    %1175 = vmatpush2.msra.mxu0 %v499
    %1176 = vmatprep.subr.mxu0 %v492
    %1177 = vmatpush2.msra.mxu0 %v491
    %1178 = vmatprep.subr.mxu0 %v484
    %1179 = vmatpush2.msra.mxu0 %v483
    %1180 = vmatprep.subr.mxu0 %v476
    %1181 = vmatpush2.msra.mxu0 %v475
    %1182 = vmatprep.subr.mxu0 %v468
    %1183 = vmatpush2.msra.mxu0 %v467
    %1184 = vmatprep.subr.mxu0 %v460
    %1185 = vmatpush2.msra.mxu0 %v459
    %1186 = vmatprep.subr.mxu0 %v452
    %1187 = vmatpush2.msra.mxu0 %v451
    %1188 = vmatprep.subr.mxu0 %v444
    %1189 = vmatpush2.msra.mxu0 %v443
    %1190 = vmatprep.mubr.f32.mxu0 %v624
    %1191 = vmatmul.mubr.f32.gmra.mxu0 %v622
    %v1192 = vpop.f32.mrf.mxu0
    %v1193 = vadd.f32 %v1122, %v1192
    %v1194 = vpop.f32.mrf.mxu0
    %v1195 = vadd.f32 %v1124, %v1194
    %1196 = vdwg.mxu0
    %v1205 = vcombine.low %v767, %v769
    %v1206 = vcombine.low %v909, %v911
    %v1208 = vunpack.c.l.s4 1983009808
    %v1209 = vunpack.c.0.s8 %v1208
    %v1210 = vlaneseq
    %v1211 = vshrl.u32 %v1210, 7
    %v1212 = vsub.s32 %v1209, %v1211
    %v1213 = vrot.slane %v1205, %v1212
    %v1215 = vunpack.c.l.s4 1983009808
    %v1216 = vunpack.c.0.s8 %v1215
    %v1217 = vlaneseq
    %v1218 = vshrl.u32 %v1217, 7
    %v1219 = vsub.s32 %v1216, %v1218
    %v1220 = vrot.slane %v1206, %v1219
    %v1221 = vcombine.low %v1213, %v1220
    %v1222 = vcombine.low %v1051, %v1053
    %v1223 = vcombine.low %v1193, %v1195
    %v1225 = vunpack.c.l.s4 1983009808
    %v1226 = vunpack.c.0.s8 %v1225
    %v1227 = vlaneseq
    %v1228 = vshrl.u32 %v1227, 7
    %v1229 = vsub.s32 %v1226, %v1228
    %v1230 = vrot.slane %v1222, %v1229
    %v1232 = vunpack.c.l.s4 1983009808
    %v1233 = vunpack.c.0.s8 %v1232
    %v1234 = vlaneseq
    %v1235 = vshrl.u32 %v1234, 7
    %v1236 = vsub.s32 %v1233, %v1235
    %v1237 = vrot.slane %v1223, %v1236
    %v1238 = vcombine.low %v1230, %v1237
    %1241 = vst [vmem:[#allocation8] sm:$0xff] %v1221
    %1242 = vst [vmem:[#allocation8 + $0x8] sm:$0xff] %v1238
    // Predicated region
    $region26: #{tpu_custom_call.1} parent=1 // pred_check
      _
    $region27: #{tpu_custom_call.1} parent=1 // pred_check_branch
      %1244 = sbr.rel (0) target = $region29
    $region28: #{tpu_custom_call.1} parent=1 // pred_region
      %s1246 = ssub.s32 256, 256
      %1247 = vsyncadd [#allocation4], %s1246
      %s1249 = sshll.u32 [#allocation8], 4
      %s1250 = int_to_ptr.vmem [resolvable:$true] %s1249
      %1252 = dma.vmem_to_hbm [thread:$0]  %s1250, 256, %s3, [#allocation4]
    $region29: #{tpu_custom_call.1} parent=1 // pred_fallthru
      _
    // Predicated region
    $region30: #{tpu_custom_call.1} parent=1 // pred_check
      _
    $region31: #{tpu_custom_call.1} parent=1 // pred_check_branch
      %1254 = sbr.rel (0) target = $region33
    $region32: #{tpu_custom_call.1} parent=1 // pred_region
      %1255 = dma.done [#allocation4], 256
    $region33: #{tpu_custom_call.1} parent=1 // pred_fallthru
      _
    %1256 = vsyncpa [#allocation3], 1
    %1257 = vsyncpa [#allocation6], 1
    %1258 = vsyncpa [#allocation4], 1

</llo_original>
